<compile_context>
chip_gen: v7x
topology: tpu7x:2x2x1
jax: 0.10.0
libtpu: 0.0.40
codegen_flags: <defaults>
</compile_context>

<pallas_src>
import jax
import jax.numpy as jnp
import numpy as np
from jax.experimental import pallas as pl
from jax.experimental.pallas import tpu as pltpu


def _pe_kernel(inv_freq_ref, phase_ref, o_ref):
    # inv_freq_ref, phase_ref: (1, H) f32 (resident in VMEM); o_ref: (TILE_S, H) tile.
    tile_s, h = o_ref.shape
    i = pl.program_id(0)
    # Absolute position index down the rows of this tile (row axis = sublanes).
    pos = (i * tile_s
           + jax.lax.broadcasted_iota(jnp.int32, (tile_s, h), 0)).astype(jnp.float32)
    # even col j=2k  -> sin(pos * inv_freq)
    # odd  col j=2k+1 -> cos(pos * inv_freq) == sin(pos * inv_freq + pi/2)
    angle = pos * inv_freq_ref[...] + phase_ref[...]
    o_ref[...] = jnp.sin(angle).astype(o_ref.dtype)


def positional_encoding(x, hidden_size, *, tile_s=512, out_dtype=jnp.float32):
    """Pallas equivalent of PositionalEncoding.forward(x)."""
    batch_size, seq_len = x.shape  # only the shape is used, exactly like the PyTorch module
    h = int(hidden_size)

    # Host-side column-only constants (H values each).
    j = np.arange(h)
    two_i = (j - (j % 2)).astype(np.float32)                       # 2 * (j // 2)
    inv_freq = np.exp(-(two_i / np.float32(h)) * np.log(np.float32(10000.0)))
    inv_freq = inv_freq.astype(np.float32)[None, :]                # (1, H)
    phase = ((j % 2).astype(np.float32) * np.float32(np.pi / 2.0))[None, :]  # (1, H)

    # Tile over seq_len; keep hidden_size whole so the last dim is lane-dense.
    ts = min(int(tile_s), int(seq_len))
    if ts != seq_len:
        # Partial-sequence blocks must have a sublane-aligned row count.
        ts = max(8, (ts // 8) * 8)
    grid = (pl.cdiv(seq_len, ts),)

    enc = pl.pallas_call(
        _pe_kernel,
        out_shape=jax.ShapeDtypeStruct((seq_len, h), out_dtype),
        grid_spec=pltpu.PrefetchScalarGridSpec(
            num_scalar_prefetch=0,
            grid=grid,
            in_specs=[
                pl.BlockSpec((1, h), lambda i: (0, 0)),   # inv_freq row (stays resident)
                pl.BlockSpec((1, h), lambda i: (0, 0)),   # phase row   (stays resident)
            ],
            out_specs=pl.BlockSpec((ts, h), lambda i: (i, 0)),
        ),
        compiler_params=pltpu.CompilerParams(
            dimension_semantics=("parallel",),
        ),
    )(jnp.asarray(inv_freq), jnp.asarray(phase))
    return enc[None, :, :]  # (1, seq_len, hidden_size)


def _reference(seq_len, hidden_size):
    pos = np.arange(0, seq_len, dtype=np.float32)[:, None]
    _2i = np.arange(0, hidden_size, 2, dtype=np.float32)
    enc = np.zeros((seq_len, hidden_size), dtype=np.float32)
    enc[:, 0::2] = np.sin(pos / 10000 ** (_2i / hidden_size))
    enc[:, 1::2] = np.cos(pos / 10000 ** (_2i / hidden_size))
    return enc[None, :, :]


if __name__ == "__main__":
    key = jax.random.PRNGKey(0)
    batch, seq_len, hidden_size = 2, 8, 32
    x = jax.random.randint(key, (batch, seq_len), 0, 1000, dtype=jnp.int32)

    out = positional_encoding(x, hidden_size)
    out = jax.block_until_ready(out)

    ref = _reference(seq_len, hidden_size)
    assert out.shape == (1, seq_len, hidden_size)
    np.testing.assert_allclose(np.asarray(out), ref, rtol=1e-5, atol=1e-5)
    print("KERNEL_OK")
</pallas_src>

<mosaic_0001>
module attributes {stable_mosaic.version = 11 : i64} {
  func.func @_pe_kernel(%arg0: i32, %arg1: memref<1x32xf32, #tpu.memory_space<vmem>>, %arg2: memref<1x32xf32, #tpu.memory_space<vmem>>, %arg3: memref<8x32xf32, #tpu.memory_space<vmem>>) attributes {dimension_semantics = [#tpu.dimension_semantics<parallel>], iteration_bounds = array<i64: 1>, scalar_prefetch = 0 : i64, scratch_operands = 0 : i64, tpu.core_type = #tpu.core_type<tc>, window_params = [{pipeline_mode = #tpu.pipeline_mode<synchronous>, transform_indices = @transform_0, window_bounds = array<i64: 1, 32>}, {pipeline_mode = #tpu.pipeline_mode<synchronous>, transform_indices = @transform_1, window_bounds = array<i64: 1, 32>}, {transform_indices = @transform_2, window_bounds = array<i64: 8, 32>}]} {
    %c8_i32 = arith.constant 8 : i32
    %0 = arith.muli %arg0, %c8_i32 : i32
    %1 = tpu.iota {dimensions = array<i32: 0>} : vector<8x32xi32>
    %2 = vector.broadcast %0 : i32 to vector<8x32xi32>
    %3 = arith.addi %2, %1 : vector<8x32xi32>
    %4 = arith.sitofp %3 : vector<8x32xi32> to vector<8x32xf32>
    %c0 = arith.constant 0 : index
    %c0_0 = arith.constant 0 : index
    %5 = vector.load %arg1[%c0, %c0_0] : memref<1x32xf32, #tpu.memory_space<vmem>>, vector<1x32xf32>
    %6 = vector.broadcast %5 : vector<1x32xf32> to vector<8x32xf32>
    %7 = arith.mulf %4, %6 : vector<8x32xf32>
    %c0_1 = arith.constant 0 : index
    %c0_2 = arith.constant 0 : index
    %8 = vector.load %arg2[%c0_1, %c0_2] : memref<1x32xf32, #tpu.memory_space<vmem>>, vector<1x32xf32>
    %9 = vector.broadcast %8 : vector<1x32xf32> to vector<8x32xf32>
    %10 = arith.addf %7, %9 : vector<8x32xf32>
    %11 = math.sin %10 : vector<8x32xf32>
    %c0_3 = arith.constant 0 : index
    %c0_4 = arith.constant 0 : index
    %12 = vector.load %arg3[%c0_3, %c0_4] : memref<8x32xf32, #tpu.memory_space<vmem>>, vector<8x32xf32>
    tpu.vector_store %arg3[%c0_3, %c0_4], %11 {strides = array<i32>} : memref<8x32xf32, #tpu.memory_space<vmem>>, vector<8x32xf32>,
    return
  }
  func.func @transform_0(%arg0: i32) -> (i32, i32) {
    %c0_i32 = arith.constant 0 : i32
    %c0_i32_0 = arith.constant 0 : i32
    %c0_i32_1 = arith.constant 0 : i32
    return %c0_i32, %c0_i32_0 : i32, i32
  }
  func.func @transform_1(%arg0: i32) -> (i32, i32) {
    %c0_i32 = arith.constant 0 : i32
    %c0_i32_0 = arith.constant 0 : i32
    %c0_i32_1 = arith.constant 0 : i32
    return %c0_i32, %c0_i32_0 : i32, i32
  }
  func.func @transform_2(%arg0: i32) -> (i32, i32) {
    %c0_i32 = arith.constant 0 : i32
    %c0_i32_0 = arith.constant 0 : i32
    return %arg0, %c0_i32 : i32, i32
  }
}

</mosaic_0001>

<llo_original>
// kernel: tpu_custom_call.1
$region0: #{tpu_custom_call.1}
  #allocation0 [shape = 'u32[]', space=smem, size = 0x4, offset = 0x4, fixed_abs, tag = 'smem constant byte address 0x4 - core index']
  #allocation1 [shape = 'u32[144,128]{1,0:T(1,128)}', space=vmem, size = 0x12000, scoped, tag = 'internal scratch']
  %s0 = inlined_call_operand.hbm [shape: f32[1,32], index: 0, kind: input, shape index: {}]
  %s1 = inlined_call_operand.vmem [shape: f32[1,32], index: 1, kind: input, shape index: {}]
  %s2 = inlined_call_operand.hbm [shape: f32[8,32], index: 2, kind: output, shape index: {}]
  %s3 = sld [smem:[#allocation0]]
  $region22: #{tpu_custom_call.1} parent=0
    _
  %s5 = ssub.s32 1, %s3
  %s6 = scalar_select 0, %s5, %s3
  $region1: #{tpu_custom_call.1} parent=0
    #allocation2 [shape = 'u8[512]{0}', space=vmem, size = 0x400, scoped, tag = 'input window, operand 0, single buffered']
    #allocation3 [shape = 's32[1]{0}', space=sflag, size = 0x4, scoped, tag = 'scoped memory for tpu_custom_call.1']
    #allocation4 [shape = 's32[1]{0}', space=sflag, size = 0x4, scoped, tag = 'scoped memory for tpu_custom_call.1']
    #allocation5 [shape = 'u8[4096]{0}', space=vmem, size = 0x1000, scoped, tag = 'output window, operand 0, single buffered']
    %7 = vsyncpa [#allocation3], 0
    %8 = vsyncpa [#allocation4], 0
    // Predicated region
    $region2: #{tpu_custom_call.1} parent=1 // pred_check
      _
    $region3: #{tpu_custom_call.1} parent=1 // pred_check_branch
      %10 = sbr.rel (0) target = $region5
    $region4: #{tpu_custom_call.1} parent=1 // pred_region
      %s12 = ssub.s32 16, 16
      %13 = vsyncadd [#allocation3], %s12
      %s15 = sshll.u32 [#allocation2], 4
      %s16 = int_to_ptr.vmem [resolvable:$true] %s15
      %18 = dma.hbm_to_vmem [thread:$0]  %s0, 16, %s16, [#allocation3]
    $region5: #{tpu_custom_call.1} parent=1 // pred_fallthru
      _
    // Predicated region
    $region6: #{tpu_custom_call.1} parent=1 // pred_check
      _
    $region7: #{tpu_custom_call.1} parent=1 // pred_check_branch
      %20 = sbr.rel (0) target = $region9
    $region8: #{tpu_custom_call.1} parent=1 // pred_region
      _
    $region9: #{tpu_custom_call.1} parent=1 // pred_fallthru
      _
    // Predicated region
    $region10: #{tpu_custom_call.1} parent=1 // pred_check
      _
    $region11: #{tpu_custom_call.1} parent=1 // pred_check_branch
      %22 = sbr.rel (0) target = $region13
    $region12: #{tpu_custom_call.1} parent=1 // pred_region
      %23 = dma.done [#allocation3], 16
    $region13: #{tpu_custom_call.1} parent=1 // pred_fallthru
      _
    %s24 = smul.u32 0, 8
    %v25 = vlaneseq
    %v26 = vshrl.u32 %v25, 7
    %v27 = vstv %s24
    %v28 = vadd.s32 %v27, %v26
    %v29 = vcvt.s32.f32 %v28
    %v30 = vld [vmem:[#allocation2] sm:$0x1]
    %v32 = vlaneseq
    %v33 = vshrl.u32 %v32, 7
    %v34 = vsub.s32 0, %v33
    %v35 = vrot.slane %v30, %v34
    %v37 = vmul.f32 %v29, %v35
    %v38 = vld [vmem:[%s1] sm:$0x1]
    %v40 = vlaneseq
    %v41 = vshrl.u32 %v40, 7
    %v42 = vsub.s32 0, %v41
    %v43 = vrot.slane %v38, %v42
    %v45 = vadd.f32 %v37, %v43
    %v46 = vand.u32 2147483647, %v45
    %vm47 = vcmp.le.f32.partialorder %v46, 0.7853982
    %vm48 = vcmp.lt.s32.totalorder %v45, 0
    %v49 = vand.u32 %v45, 2139095040
    %v50 = vshrl.u32 %v49, 23
    %v51 = vsub.s32 %v50, 127
    %v52 = vand.u32 2147483647, %v45
    %v53 = vand.u32 %v52, 8388607
    %v54 = vor.u32 %v53, 8388608
    %v55 = vsub.s32 0, %v54
    %v56 = vadd.s32 %v51, 1
    %vm57 = vcmp.gt.s32.totalorder %v56, 0
    %v58 = vsel %vm57, %v56, 0
    %v59 = vshrl.u32 %v58, 5
    %v60 = vand.u32 %v58, 31
    %v61 = vsub.s32 32, %v60
    %v62 = vshrl.u32 683565275, %v61
    %v63 = vshll.u32 683565275, %v60
    %v64 = vshrl.u32 2475754826, %v61
    %v65 = vor.u32 %v63, %v64
    %v66 = vshll.u32 2475754826, %v60
    %v67 = vshrl.u32 2131351028, %v61
    %v68 = vor.u32 %v66, %v67
    %v69 = vshll.u32 2131351028, %v60
    %v70 = vshrl.u32 2102212464, %v61
    %v71 = vor.u32 %v69, %v70
    %v72 = vshll.u32 2102212464, %v60
    %v73 = vshrl.u32 920167782, %v61
    %v74 = vor.u32 %v72, %v73
    %v75 = vshll.u32 920167782, %v60
    %v76 = vshrl.u32 1326507024, %v61
    %v77 = vor.u32 %v75, %v76
    %vm78 = vcmp.lt.s32.totalorder %v59, 1
    %vm79 = vcmp.lt.s32.totalorder %v59, 2
    %vm80 = vcmp.lt.s32.totalorder %v59, 3
    %vm81 = vcmp.lt.s32.totalorder %v59, 4
    %v82 = vsel %vm78, %v62, %v65
    %v83 = vsel %vm81, %v71, 2102212464
    %v84 = vsel %vm80, %v68, %v83
    %v85 = vsel %vm79, %v82, %v84
    %v86 = vsel %vm78, %v65, %v68
    %v87 = vsel %vm81, %v74, 920167782
    %v88 = vsel %vm80, %v71, %v87
    %v89 = vsel %vm79, %v86, %v88
    %v90 = vsel %vm78, %v68, %v71
    %v91 = vsel %vm81, %v77, 1326507024
    %v92 = vsel %vm80, %v74, %v91
    %v93 = vsel %vm79, %v90, %v92
    %v94 = vshll.u32 %v54, 8
    %v95 = vmul.u32.u64.compose %v94, %v93
    %v96 = vextract.low.u32 %v95
    %v97 = vextract.high.u32 %v95
    %v98 = vmul.u32.u64.compose %v94, %v89
    %v99 = vextract.low.u32 %v98
    %v100 = vextract.high.u32 %v98
    %v101 = vmul.u32 %v94, %v85
    %v102 = vadd.s32 %v97, %v99
    %vm103 = vc.u32 %v97, %v99
    %v104 = vadd.s32 %v100, 1
    %v105 = vsel %vm103, %v104, %v100
    %v106 = vadd.s32 %v101, %v105
    %v107 = vadd.s32 %v106, 536870912
    %v108 = vshrl.u32 %v107, 30
    %v109 = vshll.u32 %v108, 30
    %v110 = vsub.s32 %v106, %v109
    %vm111 = vcmp.lt.s32.totalorder %v110, 0
    %v112 = vsub.s32 0, %v110
    %v113 = vsel %vm111, %v112, %v110
    %v114 = vclz %v113
    %v115 = vsub.s32 %v114, 2
    %vm116 = vcmp.gt.s32.totalorder 0, %v115
    %v117 = vsel %vm116, 0, %v115
    %v118 = vsub.s32 32, %v117
    %v119 = vshll.u32 %v110, %v117
    %v120 = vshrl.u32 %v102, %v118
    %v121 = vor.u32 %v119, %v120
    %v122 = vsub.s32 4294967266, %v117
    %v123 = vadd.s32 %v122, 127
    %v124 = vshll.u32 %v123, 23
    %v125 = vor.u32 4788187, %v124
    %v126 = vand.u32 2147483647, %v125
    %v128 = vcvt.s32.f32 %v121
    %v129 = vmul.f32 %v128, %v126
    %v130 = vxor.u32 %v129, 2147483648
    %v131 = vsel %vm48, %v130, %v129
    %v132 = vsub.s32 4, %v108
    %v133 = vsel %vm48, %v132, %v108
    %v134 = vsel %vm47, %v45, %v131
    %v135 = vsel %vm47, 0, %v133
    %v136 = vcosq.f32.pop %v134
    %v137 = vsinq.f32.pop %v134
    %vm138 = vweird.f32 %v45
    %v139 = vadd.s32 %v135, 3
    %v140 = vand.u32 %v139, 3
    %vm141 = vcmp.lt.s32.totalorder %v140, 2
    %vm142 = vcmp.eq.s32.totalorder %v140, 0
    %v143 = vxor.u32 %v137, 2147483648
    %v144 = vsel %vm142, %v136, %v143
    %vm145 = vcmp.eq.s32.totalorder %v140, 2
    %v146 = vxor.u32 %v136, 2147483648
    %v147 = vsel %vm145, %v146, %v137
    %v148 = vsel %vm141, %v144, %v147
    %v149 = vsel %vm138, nan, %v148
    %vm150 = vcmask 261120
    %151 = vst.msk [vmem:[#allocation5] sm:$0xff] %vm150, %v149
    // Predicated region
    $region14: #{tpu_custom_call.1} parent=1 // pred_check
      _
    $region15: #{tpu_custom_call.1} parent=1 // pred_check_branch
      %153 = sbr.rel (0) target = $region17
    $region16: #{tpu_custom_call.1} parent=1 // pred_region
      %s155 = ssub.s32 128, 128
      %156 = vsyncadd [#allocation4], %s155
      %s158 = sshll.u32 [#allocation5], 4
      %s159 = int_to_ptr.vmem [resolvable:$true] %s158
      %161 = dma.vmem_to_hbm [thread:$0]  %s159, 128, %s2, [#allocation4]
    $region17: #{tpu_custom_call.1} parent=1 // pred_fallthru
      _
    // Predicated region
    $region18: #{tpu_custom_call.1} parent=1 // pred_check
      _
    $region19: #{tpu_custom_call.1} parent=1 // pred_check_branch
      %163 = sbr.rel (0) target = $region21
    $region20: #{tpu_custom_call.1} parent=1 // pred_region
      %164 = dma.done [#allocation4], 128
    $region21: #{tpu_custom_call.1} parent=1 // pred_fallthru
      _
    %165 = vsyncpa [#allocation3], 1
    %166 = vsyncpa [#allocation4], 1

</llo_original>
